<compile_context>
chip_gen: v6e
topology: v6e:2x2x1
jax: 0.10.0
libtpu: 0.0.40
codegen_flags: <defaults>
</compile_context>

<pallas_src>
import jax
import jax.numpy as jnp
from jax.experimental import pallas as pl
from jax.experimental.pallas import tpu as pltpu


def mlp_kernel(xT_ref, w1_ref, b1_ref, w2_ref, b2_ref,
               w3_ref, b3_ref, w4_ref, b4_ref, oT_ref):
    cd = w1_ref.dtype                       # compute (matmul-input) dtype, e.g. bf16
    x = xT_ref[...]                         # (D, tile_b), batch on lanes

    # fc1 + relu   (dropout1 is identity in eval mode)
    h = jnp.dot(w1_ref[...], x, preferred_element_type=jnp.float32)        # (32, tb)
    h = jnp.maximum(h + b1_ref[...], 0.0)                                   # f32
    # fc2 + relu   (dropout2 is identity in eval mode)
    h = jnp.dot(w2_ref[...], h.astype(cd), preferred_element_type=jnp.float32)  # (16, tb)
    h = jnp.maximum(h + b2_ref[...], 0.0)
    # fc3 + relu
    h = jnp.dot(w3_ref[...], h.astype(cd), preferred_element_type=jnp.float32)  # (8, tb)
    h = jnp.maximum(h + b3_ref[...], 0.0)
    # fc4 (logits, no activation)
    h = jnp.dot(w4_ref[...], h.astype(cd), preferred_element_type=jnp.float32)  # (2, tb)
    oT_ref[...] = (h + b4_ref[...]).astype(oT_ref.dtype)


def dnn_fc0002_forward(x, params, *, tile_b=1024, compute_dtype=jnp.bfloat16):
    """x: (B, input_size) float32.
    params: w1..w4 in PyTorch (out_features, in_features) layout, b1..b4 as (out, 1).
    Returns (B, 2) float32 logits."""
    B, D = x.shape
    assert tile_b % 128 == 0, "tile_b must be a multiple of the 128-lane width"

    w1, w2, w3, w4 = (params[f"w{i}"].astype(compute_dtype) for i in range(1, 5))
    b1, b2, b3, b4 = (params[f"b{i}"].astype(jnp.float32) for i in range(1, 5))
    out_dim = w4.shape[0]

    # Pad batch to a multiple of tile_b; padded columns are sliced off at the end.
    n_tiles = pl.cdiv(B, tile_b)
    b_pad = n_tiles * tile_b
    xT = jnp.pad(x.astype(compute_dtype).T, ((0, 0), (0, b_pad - B)))  # (D, b_pad)

    full = lambda a: pl.BlockSpec(a.shape, lambda i: (0, 0))  # resident weights/biases

    # VMEM budget: x tile (double-buffered) + out tile (double-buffered)
    # + f32 intermediates + slack for the ~5 KiB of weights.
    bytes_per_row = (2 * D * jnp.dtype(compute_dtype).itemsize
                     + 2 * out_dim * 4
                     + 4 * 32 * 4)
    vmem_bytes = int(min(max(tile_b * bytes_per_row + (1 << 20), 32 << 20), 48 << 20))

    out_T = pl.pallas_call(
        mlp_kernel,
        out_shape=jax.ShapeDtypeStruct((out_dim, b_pad), jnp.float32),
        grid_spec=pltpu.PrefetchScalarGridSpec(
            num_scalar_prefetch=0,
            grid=(n_tiles,),
            in_specs=[
                pl.BlockSpec((D, tile_b), lambda i: (0, i)),   # x tile, batch on lanes
                full(w1), full(b1),
                full(w2), full(b2),
                full(w3), full(b3),
                full(w4), full(b4),
            ],
            out_specs=pl.BlockSpec((out_dim, tile_b), lambda i: (0, i)),
        ),
        compiler_params=pltpu.CompilerParams(
            dimension_semantics=("parallel",),   # shards batch tiles across TCs on v7x
            vmem_limit_bytes=vmem_bytes),
    )(xT, w1, b1, w2, b2, w3, b3, w4, b4)

    return out_T.T[:B]


def init_params(key, input_size):
    """Deterministic synthetic init (PyTorch-Linear-like uniform fan-in).
    Weights kept in PyTorch (out_features, in_features) layout; biases as (out, 1)."""
    dims = [(input_size, 32), (32, 16), (16, 8), (8, 2)]
    params = {}
    for idx, (fan_in, fan_out) in enumerate(dims, start=1):
        key, kw, kb = jax.random.split(key, 3)
        bound = float(1.0 / jnp.sqrt(fan_in))
        params[f"w{idx}"] = jax.random.uniform(
            kw, (fan_out, fan_in), jnp.float32, -bound, bound)
        params[f"b{idx}"] = jax.random.uniform(
            kb, (fan_out, 1), jnp.float32, -bound, bound)
    return params


def reference_forward(x, params, compute_dtype=jnp.bfloat16):
    """Pure-JAX reference mirroring the kernel's numerics (bf16 dot inputs, f32 accum)."""
    cd = compute_dtype
    h = x
    for i in (1, 2, 3):
        w = params[f"w{i}"].astype(cd)
        b = params[f"b{i}"].reshape(1, -1)
        h = jnp.maximum(
            jnp.dot(h.astype(cd), w.T, preferred_element_type=jnp.float32) + b, 0.0)
    w = params["w4"].astype(cd)
    return (jnp.dot(h.astype(cd), w.T, preferred_element_type=jnp.float32)
            + params["b4"].reshape(1, -1))


if __name__ == "__main__":
    key = jax.random.PRNGKey(0)
    input_size = 16
    batch = 8

    kx, kp = jax.random.split(key)
    x = jax.random.normal(kx, (batch, input_size), jnp.float32)
    params = init_params(kp, input_size)

    out = jax.block_until_ready(dnn_fc0002_forward(x, params))
    ref = reference_forward(x, params)

    assert out.shape == (batch, 2)
    assert jnp.allclose(out, ref, atol=1e-3, rtol=1e-3), "mismatch vs reference"

    print("KERNEL_OK")
</pallas_src>

<mosaic_0001>
module attributes {stable_mosaic.version = 11 : i64} {
  func.func @mlp_kernel(%arg0: i32, %arg1: memref<16x1024xbf16, #tpu.memory_space<vmem>>, %arg2: memref<32x16xbf16, #tpu.memory_space<vmem>>, %arg3: memref<32x1xf32, #tpu.memory_space<vmem>>, %arg4: memref<16x32xbf16, #tpu.memory_space<vmem>>, %arg5: memref<16x1xf32, #tpu.memory_space<vmem>>, %arg6: memref<8x16xbf16, #tpu.memory_space<vmem>>, %arg7: memref<8x1xf32, #tpu.memory_space<vmem>>, %arg8: memref<2x8xbf16, #tpu.memory_space<vmem>>, %arg9: memref<2x1xf32, #tpu.memory_space<vmem>>, %arg10: memref<2x1024xf32, #tpu.memory_space<vmem>>) attributes {dimension_semantics = [#tpu.dimension_semantics<parallel>], iteration_bounds = array<i64: 1>, scalar_prefetch = 0 : i64, scratch_operands = 0 : i64, tpu.core_type = #tpu.core_type<tc>, window_params = [{transform_indices = @transform_0, window_bounds = array<i64: 16, 1024>}, {pipeline_mode = #tpu.pipeline_mode<synchronous>, transform_indices = @transform_1, window_bounds = array<i64: 32, 16>}, {pipeline_mode = #tpu.pipeline_mode<synchronous>, transform_indices = @transform_2, window_bounds = array<i64: 32, 1>}, {pipeline_mode = #tpu.pipeline_mode<synchronous>, transform_indices = @transform_3, window_bounds = array<i64: 16, 32>}, {pipeline_mode = #tpu.pipeline_mode<synchronous>, transform_indices = @transform_4, window_bounds = array<i64: 16, 1>}, {pipeline_mode = #tpu.pipeline_mode<synchronous>, transform_indices = @transform_5, window_bounds = array<i64: 8, 16>}, {pipeline_mode = #tpu.pipeline_mode<synchronous>, transform_indices = @transform_6, window_bounds = array<i64: 8, 1>}, {pipeline_mode = #tpu.pipeline_mode<synchronous>, transform_indices = @transform_7, window_bounds = array<i64: 2, 8>}, {pipeline_mode = #tpu.pipeline_mode<synchronous>, transform_indices = @transform_8, window_bounds = array<i64: 2, 1>}, {transform_indices = @transform_9, window_bounds = array<i64: 2, 1024>}]} {
    %c0 = arith.constant 0 : index
    %c0_0 = arith.constant 0 : index
    %0 = vector.load %arg1[%c0, %c0_0] : memref<16x1024xbf16, #tpu.memory_space<vmem>>, vector<16x1024xbf16>
    %c0_1 = arith.constant 0 : index
    %c0_2 = arith.constant 0 : index
    %1 = vector.load %arg2[%c0_1, %c0_2] : memref<32x16xbf16, #tpu.memory_space<vmem>>, vector<32x16xbf16>
    %cst = arith.constant dense<0.000000e+00> : vector<32x1024xf32>
    %2 = tpu.matmul %1, %0, %cst {dimension_numbers = #tpu.dot_dimension_numbers<[1], [0], [0], [1], [0, 0, 1, 1], [], []>} : vector<32x16xbf16>, vector<16x1024xbf16>, vector<32x1024xf32> -> vector<32x1024xf32>
    %c0_3 = arith.constant 0 : index
    %c0_4 = arith.constant 0 : index
    %3 = vector.load %arg3[%c0_3, %c0_4] : memref<32x1xf32, #tpu.memory_space<vmem>>, vector<32x1xf32>
    %4 = vector.broadcast %3 : vector<32x1xf32> to vector<32x1024xf32>
    %5 = arith.addf %2, %4 : vector<32x1024xf32>
    %cst_5 = arith.constant 0.000000e+00 : f32
    %6 = vector.broadcast %cst_5 : f32 to vector<32x1024xf32>
    %7 = arith.maximumf %5, %6 : vector<32x1024xf32>
    %c0_6 = arith.constant 0 : index
    %c0_7 = arith.constant 0 : index
    %8 = vector.load %arg4[%c0_6, %c0_7] : memref<16x32xbf16, #tpu.memory_space<vmem>>, vector<16x32xbf16>
    %9 = arith.truncf %7 : vector<32x1024xf32> to vector<32x1024xbf16>
    %cst_8 = arith.constant dense<0.000000e+00> : vector<16x1024xf32>
    %10 = tpu.matmul %8, %9, %cst_8 {dimension_numbers = #tpu.dot_dimension_numbers<[1], [0], [0], [1], [0, 0, 1, 1], [], []>} : vector<16x32xbf16>, vector<32x1024xbf16>, vector<16x1024xf32> -> vector<16x1024xf32>
    %c0_9 = arith.constant 0 : index
    %c0_10 = arith.constant 0 : index
    %11 = vector.load %arg5[%c0_9, %c0_10] : memref<16x1xf32, #tpu.memory_space<vmem>>, vector<16x1xf32>
    %12 = vector.broadcast %11 : vector<16x1xf32> to vector<16x1024xf32>
    %13 = arith.addf %10, %12 : vector<16x1024xf32>
    %cst_11 = arith.constant 0.000000e+00 : f32
    %14 = vector.broadcast %cst_11 : f32 to vector<16x1024xf32>
    %15 = arith.maximumf %13, %14 : vector<16x1024xf32>
    %c0_12 = arith.constant 0 : index
    %c0_13 = arith.constant 0 : index
    %16 = vector.load %arg6[%c0_12, %c0_13] : memref<8x16xbf16, #tpu.memory_space<vmem>>, vector<8x16xbf16>
    %17 = arith.truncf %15 : vector<16x1024xf32> to vector<16x1024xbf16>
    %cst_14 = arith.constant dense<0.000000e+00> : vector<8x1024xf32>
    %18 = tpu.matmul %16, %17, %cst_14 {dimension_numbers = #tpu.dot_dimension_numbers<[1], [0], [0], [1], [0, 0, 1, 1], [], []>} : vector<8x16xbf16>, vector<16x1024xbf16>, vector<8x1024xf32> -> vector<8x1024xf32>
    %c0_15 = arith.constant 0 : index
    %c0_16 = arith.constant 0 : index
    %19 = vector.load %arg7[%c0_15, %c0_16] : memref<8x1xf32, #tpu.memory_space<vmem>>, vector<8x1xf32>
    %20 = vector.broadcast %19 : vector<8x1xf32> to vector<8x1024xf32>
    %21 = arith.addf %18, %20 : vector<8x1024xf32>
    %cst_17 = arith.constant 0.000000e+00 : f32
    %22 = vector.broadcast %cst_17 : f32 to vector<8x1024xf32>
    %23 = arith.maximumf %21, %22 : vector<8x1024xf32>
    %c0_18 = arith.constant 0 : index
    %c0_19 = arith.constant 0 : index
    %24 = vector.load %arg8[%c0_18, %c0_19] : memref<2x8xbf16, #tpu.memory_space<vmem>>, vector<2x8xbf16>
    %25 = arith.truncf %23 : vector<8x1024xf32> to vector<8x1024xbf16>
    %cst_20 = arith.constant dense<0.000000e+00> : vector<2x1024xf32>
    %26 = tpu.matmul %24, %25, %cst_20 {dimension_numbers = #tpu.dot_dimension_numbers<[1], [0], [0], [1], [0, 0, 1, 1], [], []>} : vector<2x8xbf16>, vector<8x1024xbf16>, vector<2x1024xf32> -> vector<2x1024xf32>
    %c0_21 = arith.constant 0 : index
    %c0_22 = arith.constant 0 : index
    %27 = vector.load %arg9[%c0_21, %c0_22] : memref<2x1xf32, #tpu.memory_space<vmem>>, vector<2x1xf32>
    %28 = vector.broadcast %27 : vector<2x1xf32> to vector<2x1024xf32>
    %29 = arith.addf %26, %28 : vector<2x1024xf32>
    %c0_23 = arith.constant 0 : index
    %c0_24 = arith.constant 0 : index
    %30 = vector.load %arg10[%c0_23, %c0_24] : memref<2x1024xf32, #tpu.memory_space<vmem>>, vector<2x1024xf32>
    tpu.vector_store %arg10[%c0_23, %c0_24], %29 {strides = array<i32>} : memref<2x1024xf32, #tpu.memory_space<vmem>>, vector<2x1024xf32>,
    return
  }
  func.func @transform_0(%arg0: i32) -> (i32, i32) {
    %c0_i32 = arith.constant 0 : i32
    %c0_i32_0 = arith.constant 0 : i32
    return %c0_i32, %arg0 : i32, i32
  }
  func.func @transform_1(%arg0: i32) -> (i32, i32) {
    %c0_i32 = arith.constant 0 : i32
    %c0_i32_0 = arith.constant 0 : i32
    %c0_i32_1 = arith.constant 0 : i32
    return %c0_i32, %c0_i32_0 : i32, i32
  }
  func.func @transform_2(%arg0: i32) -> (i32, i32) {
    %c0_i32 = arith.constant 0 : i32
    %c0_i32_0 = arith.constant 0 : i32
    %c0_i32_1 = arith.constant 0 : i32
    return %c0_i32, %c0_i32_0 : i32, i32
  }
  func.func @transform_3(%arg0: i32) -> (i32, i32) {
    %c0_i32 = arith.constant 0 : i32
    %c0_i32_0 = arith.constant 0 : i32
    %c0_i32_1 = arith.constant 0 : i32
    return %c0_i32, %c0_i32_0 : i32, i32
  }
  func.func @transform_4(%arg0: i32) -> (i32, i32) {
    %c0_i32 = arith.constant 0 : i32
    %c0_i32_0 = arith.constant 0 : i32
    %c0_i32_1 = arith.constant 0 : i32
    return %c0_i32, %c0_i32_0 : i32, i32
  }
  func.func @transform_5(%arg0: i32) -> (i32, i32) {
    %c0_i32 = arith.constant 0 : i32
    %c0_i32_0 = arith.constant 0 : i32
    %c0_i32_1 = arith.constant 0 : i32
    return %c0_i32, %c0_i32_0 : i32, i32
  }
  func.func @transform_6(%arg0: i32) -> (i32, i32) {
    %c0_i32 = arith.constant 0 : i32
    %c0_i32_0 = arith.constant 0 : i32
    %c0_i32_1 = arith.constant 0 : i32
    return %c0_i32, %c0_i32_0 : i32, i32
  }
  func.func @transform_7(%arg0: i32) -> (i32, i32) {
    %c0_i32 = arith.constant 0 : i32
    %c0_i32_0 = arith.constant 0 : i32
    %c0_i32_1 = arith.constant 0 : i32
    return %c0_i32, %c0_i32_0 : i32, i32
  }
  func.func @transform_8(%arg0: i32) -> (i32, i32) {
    %c0_i32 = arith.constant 0 : i32
    %c0_i32_0 = arith.constant 0 : i32
    %c0_i32_1 = arith.constant 0 : i32
    return %c0_i32, %c0_i32_0 : i32, i32
  }
  func.func @transform_9(%arg0: i32) -> (i32, i32) {
    %c0_i32 = arith.constant 0 : i32
    %c0_i32_0 = arith.constant 0 : i32
    return %c0_i32, %arg0 : i32, i32
  }
}

</mosaic_0001>

<llo_original>
// kernel: tpu_custom_call.1
$region0: #{tpu_custom_call.1}
  #allocation0 [shape = 'u32[]', space=smem, size = 0x4, offset = 0x4, fixed_abs, tag = 'smem constant byte address 0x4 - core index']
  #allocation1 [shape = 'u32[144,128]{1,0:T(1,128)}', space=vmem, size = 0x12000, scoped, tag = 'internal scratch']
  %s0 = inlined_call_operand.vmem [shape: bf16[16,1024], index: 0, kind: input, shape index: {}]
  %s1 = inlined_call_operand.vmem [shape: bf16[32,16], index: 1, kind: input, shape index: {}]
  %s2 = inlined_call_operand.vmem [shape: f32[32,1], index: 2, kind: input, shape index: {}]
  %s3 = inlined_call_operand.vmem [shape: bf16[16,32], index: 3, kind: input, shape index: {}]
  %s4 = inlined_call_operand.vmem [shape: f32[16,1], index: 4, kind: input, shape index: {}]
  %s5 = inlined_call_operand.vmem [shape: bf16[8,16], index: 5, kind: input, shape index: {}]
  %s6 = inlined_call_operand.vmem [shape: f32[8,1], index: 6, kind: input, shape index: {}]
  %s7 = inlined_call_operand.vmem [shape: bf16[2,8], index: 7, kind: input, shape index: {}]
  %s8 = inlined_call_operand.vmem [shape: f32[2,1], index: 8, kind: input, shape index: {}]
  %s9 = inlined_call_operand.hbm [shape: f32[2,1024], index: 9, kind: output, shape index: {}]
  %s10 = sld [smem:[#allocation0]]
  $region46: #{tpu_custom_call.1} parent=0
    _
  %s12 = ssub.s32 1, %s10
  %s13 = scalar_select 0, %s12, %s10
  $region1: #{tpu_custom_call.1} parent=0
    #allocation2 [shape = 'u8[8192]{0}', space=vmem, size = 0x2000, scoped, tag = 'output window, operand 0, single buffered']
    #allocation3 [shape = 's32[1]{0}', space=sflag, size = 0x4, scoped, tag = 'scoped memory for tpu_custom_call.1']
    %14 = vsyncpa [#allocation3], 0
    // Predicated region
    $region2: #{tpu_custom_call.1} parent=1 // pred_check
      _
    $region3: #{tpu_custom_call.1} parent=1 // pred_check_branch
      %16 = sbr.rel (0) target = $region5
    $region4: #{tpu_custom_call.1} parent=1 // pred_region
      _
    $region5: #{tpu_custom_call.1} parent=1 // pred_fallthru
      _
    // Predicated region
    $region6: #{tpu_custom_call.1} parent=1 // pred_check
      _
    $region7: #{tpu_custom_call.1} parent=1 // pred_check_branch
      %18 = sbr.rel (0) target = $region9
    $region8: #{tpu_custom_call.1} parent=1 // pred_region
      _
    $region9: #{tpu_custom_call.1} parent=1 // pred_fallthru
      _
    // Predicated region
    $region10: #{tpu_custom_call.1} parent=1 // pred_check
      _
    $region11: #{tpu_custom_call.1} parent=1 // pred_check_branch
      %20 = sbr.rel (0) target = $region13
    $region12: #{tpu_custom_call.1} parent=1 // pred_region
      _
    $region13: #{tpu_custom_call.1} parent=1 // pred_fallthru
      _
    // Predicated region
    $region14: #{tpu_custom_call.1} parent=1 // pred_check
      _
    $region15: #{tpu_custom_call.1} parent=1 // pred_check_branch
      %22 = sbr.rel (0) target = $region17
    $region16: #{tpu_custom_call.1} parent=1 // pred_region
      _
    $region17: #{tpu_custom_call.1} parent=1 // pred_fallthru
      _
    // Predicated region
    $region18: #{tpu_custom_call.1} parent=1 // pred_check
      _
    $region19: #{tpu_custom_call.1} parent=1 // pred_check_branch
      %24 = sbr.rel (0) target = $region21
    $region20: #{tpu_custom_call.1} parent=1 // pred_region
      _
    $region21: #{tpu_custom_call.1} parent=1 // pred_fallthru
      _
    // Predicated region
    $region22: #{tpu_custom_call.1} parent=1 // pred_check
      _
    $region23: #{tpu_custom_call.1} parent=1 // pred_check_branch
      %26 = sbr.rel (0) target = $region25
    $region24: #{tpu_custom_call.1} parent=1 // pred_region
      _
    $region25: #{tpu_custom_call.1} parent=1 // pred_fallthru
      _
    // Predicated region
    $region26: #{tpu_custom_call.1} parent=1 // pred_check
      _
    $region27: #{tpu_custom_call.1} parent=1 // pred_check_branch
      %28 = sbr.rel (0) target = $region29
    $region28: #{tpu_custom_call.1} parent=1 // pred_region
      _
    $region29: #{tpu_custom_call.1} parent=1 // pred_fallthru
      _
    // Predicated region
    $region30: #{tpu_custom_call.1} parent=1 // pred_check
      _
    $region31: #{tpu_custom_call.1} parent=1 // pred_check_branch
      %30 = sbr.rel (0) target = $region33
    $region32: #{tpu_custom_call.1} parent=1 // pred_region
      _
    $region33: #{tpu_custom_call.1} parent=1 // pred_fallthru
      _
    // Predicated region
    $region34: #{tpu_custom_call.1} parent=1 // pred_check
      _
    $region35: #{tpu_custom_call.1} parent=1 // pred_check_branch
      %32 = sbr.rel (0) target = $region37
    $region36: #{tpu_custom_call.1} parent=1 // pred_region
      _
    $region37: #{tpu_custom_call.1} parent=1 // pred_fallthru
      _
    %v34 = vld [vmem:[%s0] sm:$0xff]
    %v35 = vld [vmem:[%s0 + $0x8] sm:$0xff]
    %v36 = vld [vmem:[%s0 + $0x10] sm:$0xff]
    %v37 = vld [vmem:[%s0 + $0x18] sm:$0xff]
    %v38 = vld [vmem:[%s0 + $0x20] sm:$0xff]
    %v39 = vld [vmem:[%s0 + $0x28] sm:$0xff]
    %v40 = vld [vmem:[%s0 + $0x30] sm:$0xff]
    %v41 = vld [vmem:[%s0 + $0x38] sm:$0xff]
    %v42 = vld [vmem:[%s1] sm:$0xf]
    %v43 = vld [vmem:[%s1 + $0x4] sm:$0xf]
    %v44 = vld [vmem:[%s1 + $0x8] sm:$0xf]
    %v45 = vld [vmem:[%s1 + $0xc] sm:$0xf]
    %v46 = vld [vmem:[%s2] sm:$0xff]
    %v47 = vld [vmem:[%s2 + $0x8] sm:$0xff]
    %v48 = vld [vmem:[%s2 + $0x10] sm:$0xff]
    %v49 = vld [vmem:[%s2 + $0x18] sm:$0xff]
    %51 = vset.pattern.permute.xlu0 0
    %52 = vperm.xlu0 %51, %v46
    %v53 = vpop.permute.xlu0 %52
    %56 = vset.pattern.permute.xlu0 0
    %57 = vperm.xlu0 %56, %v47
    %v58 = vpop.permute.xlu0 %57
    %61 = vset.pattern.permute.xlu0 0
    %62 = vperm.xlu0 %61, %v48
    %v63 = vpop.permute.xlu0 %62
    %66 = vset.pattern.permute.xlu0 0
    %67 = vperm.xlu0 %66, %v49
    %v68 = vpop.permute.xlu0 %67
    %v74 = vunpack.c.l.b16 %v42
    %v75 = vunpack.c.l.b16 %v43
    %v76 = vunpack.c.l.b16 %v44
    %v77 = vunpack.c.l.b16 %v45
    %v78 = vpack.c.b16 %v75, %v74
    %v79 = vpack.c.b16 %v77, %v76
    %v88 = vunpack.c.l.b16 %v34
    %v89 = vunpack.c.h.b16 %v34
    %v90 = vunpack.c.l.b16 %v35
    %v91 = vunpack.c.h.b16 %v35
    %v92 = vunpack.c.l.b16 %v36
    %v93 = vunpack.c.h.b16 %v36
    %v94 = vunpack.c.l.b16 %v37
    %v95 = vunpack.c.h.b16 %v37
    %v96 = vunpack.c.l.b16 %v38
    %v97 = vunpack.c.h.b16 %v38
    %v98 = vunpack.c.l.b16 %v39
    %v99 = vunpack.c.h.b16 %v39
    %v100 = vunpack.c.l.b16 %v40
    %v101 = vunpack.c.h.b16 %v40
    %v102 = vunpack.c.l.b16 %v41
    %v103 = vunpack.c.h.b16 %v41
    %v104 = vpack.c.b16 %v96, %v88
    %v105 = vpack.c.b16 %v97, %v89
    %v106 = vpack.c.b16 %v98, %v90
    %v107 = vpack.c.b16 %v99, %v91
    %v108 = vpack.c.b16 %v100, %v92
    %v109 = vpack.c.b16 %v101, %v93
    %v110 = vpack.c.b16 %v102, %v94
    %v111 = vpack.c.b16 %v103, %v95
    %vm120 = vcmask 130048
    %v122 = vsel %vm120, %v78, 0
    %v125 = vsel %vm120, %v79, 0
    %127 = vmatprep.subr.bf16.mxu0 0
    %128 = vmatpush1.bf16.msra.mxu0 0
    %129 = vmatprep.subr.bf16.mxu0 0
    %130 = vmatpush1.bf16.msra.mxu0 0
    %131 = vmatprep.subr.bf16.mxu0 0
    %132 = vmatpush1.bf16.msra.mxu0 0
    %133 = vmatprep.subr.bf16.mxu0 0
    %134 = vmatpush1.bf16.msra.mxu0 0
    %135 = vmatprep.subr.bf16.mxu0 0
    %136 = vmatpush1.bf16.msra.mxu0 0
    %137 = vmatprep.subr.bf16.mxu0 0
    %138 = vmatpush1.bf16.msra.mxu0 0
    %139 = vmatprep.subr.bf16.mxu0 0
    %140 = vmatpush1.bf16.msra.mxu0 0
    %141 = vmatprep.subr.bf16.mxu0 %v105
    %142 = vmatpush1.bf16.msra.mxu0 %v104
    %143 = vmatprep.subr.bf16.mxu0 0
    %144 = vmatpush2.bf16.msra.mxu0 0
    %145 = vmatprep.subr.bf16.mxu0 0
    %146 = vmatpush2.bf16.msra.mxu0 0
    %147 = vmatprep.subr.bf16.mxu0 0
    %148 = vmatpush2.bf16.msra.mxu0 0
    %149 = vmatprep.subr.bf16.mxu0 0
    %150 = vmatpush2.bf16.msra.mxu0 0
    %151 = vmatprep.subr.bf16.mxu0 0
    %152 = vmatpush2.bf16.msra.mxu0 0
    %153 = vmatprep.subr.bf16.mxu0 0
    %154 = vmatpush2.bf16.msra.mxu0 0
    %155 = vmatprep.subr.bf16.mxu0 0
    %156 = vmatpush2.bf16.msra.mxu0 0
    %157 = vmatprep.subr.bf16.mxu0 0
    %158 = vmatpush2.bf16.msra.mxu0 0
    %159 = vmatprep.mubr.bf16.mxu0 0
    %160 = vmatmul.mubr.bf16.gmra.mxu0 %v122
    %v161 = vpop.f32.mrf.mxu0
    %v162 = vadd.f32 %v53, %v161
    %v163 = vpop.f32.mrf.mxu0
    %v164 = vadd.f32 %v53, %v163
    %v165 = vpop.f32.mrf.mxu0
    %v166 = vadd.f32 %v58, %v165
    %v167 = vpop.f32.mrf.mxu0
    %v168 = vadd.f32 %v58, %v167
    %169 = vmatprep.mubr.bf16.mxu0 0
    %170 = vmatmul.mubr.bf16.gmra.mxu0 %v125
    %v171 = vpop.f32.mrf.mxu0
    %v172 = vadd.f32 %v63, %v171
    %v173 = vpop.f32.mrf.mxu0
    %v174 = vadd.f32 %v63, %v173
    %v175 = vpop.f32.mrf.mxu0
    %v176 = vadd.f32 %v68, %v175
    %v177 = vpop.f32.mrf.mxu0
    %v178 = vadd.f32 %v68, %v177
    %179 = vdwg.mxu0
    %180 = vmatprep.subr.bf16.mxu0 0
    %181 = vmatpush1.bf16.msra.mxu0 0
    %182 = vmatprep.subr.bf16.mxu0 0
    %183 = vmatpush1.bf16.msra.mxu0 0
    %184 = vmatprep.subr.bf16.mxu0 0
    %185 = vmatpush1.bf16.msra.mxu0 0
    %186 = vmatprep.subr.bf16.mxu0 0
    %187 = vmatpush1.bf16.msra.mxu0 0
    %188 = vmatprep.subr.bf16.mxu0 0
    %189 = vmatpush1.bf16.msra.mxu0 0
    %190 = vmatprep.subr.bf16.mxu0 0
    %191 = vmatpush1.bf16.msra.mxu0 0
    %192 = vmatprep.subr.bf16.mxu0 0
    %193 = vmatpush1.bf16.msra.mxu0 0
    %194 = vmatprep.subr.bf16.mxu0 %v107
    %195 = vmatpush1.bf16.msra.mxu0 %v106
    %196 = vmatprep.subr.bf16.mxu0 0
    %197 = vmatpush2.bf16.msra.mxu0 0
    %198 = vmatprep.subr.bf16.mxu0 0
    %199 = vmatpush2.bf16.msra.mxu0 0
    %200 = vmatprep.subr.bf16.mxu0 0
    %201 = vmatpush2.bf16.msra.mxu0 0
    %202 = vmatprep.subr.bf16.mxu0 0
    %203 = vmatpush2.bf16.msra.mxu0 0
    %204 = vmatprep.subr.bf16.mxu0 0
    %205 = vmatpush2.bf16.msra.mxu0 0
    %206 = vmatprep.subr.bf16.mxu0 0
    %207 = vmatpush2.bf16.msra.mxu0 0
    %208 = vmatprep.subr.bf16.mxu0 0
    %209 = vmatpush2.bf16.msra.mxu0 0
    %210 = vmatprep.subr.bf16.mxu0 0
    %211 = vmatpush2.bf16.msra.mxu0 0
    %212 = vmatprep.mubr.bf16.mxu0 0
    %213 = vmatmul.mubr.bf16.gmra.mxu0 %v122
    %v214 = vpop.f32.mrf.mxu0
    %v215 = vadd.f32 %v53, %v214
    %v216 = vpop.f32.mrf.mxu0
    %v217 = vadd.f32 %v53, %v216
    %v218 = vpop.f32.mrf.mxu0
    %v219 = vadd.f32 %v58, %v218
    %v220 = vpop.f32.mrf.mxu0
    %v221 = vadd.f32 %v58, %v220
    %222 = vmatprep.mubr.bf16.mxu0 0
    %223 = vmatmul.mubr.bf16.gmra.mxu0 %v125
    %v224 = vpop.f32.mrf.mxu0
    %v225 = vadd.f32 %v63, %v224
    %v226 = vpop.f32.mrf.mxu0
    %v227 = vadd.f32 %v63, %v226
    %v228 = vpop.f32.mrf.mxu0
    %v229 = vadd.f32 %v68, %v228
    %v230 = vpop.f32.mrf.mxu0
    %v231 = vadd.f32 %v68, %v230
    %232 = vdwg.mxu0
    %233 = vmatprep.subr.bf16.mxu0 0
    %234 = vmatpush1.bf16.msra.mxu0 0
    %235 = vmatprep.subr.bf16.mxu0 0
    %236 = vmatpush1.bf16.msra.mxu0 0
    %237 = vmatprep.subr.bf16.mxu0 0
    %238 = vmatpush1.bf16.msra.mxu0 0
    %239 = vmatprep.subr.bf16.mxu0 0
    %240 = vmatpush1.bf16.msra.mxu0 0
    %241 = vmatprep.subr.bf16.mxu0 0
    %242 = vmatpush1.bf16.msra.mxu0 0
    %243 = vmatprep.subr.bf16.mxu0 0
    %244 = vmatpush1.bf16.msra.mxu0 0
    %245 = vmatprep.subr.bf16.mxu0 0
    %246 = vmatpush1.bf16.msra.mxu0 0
    %247 = vmatprep.subr.bf16.mxu0 %v109
    %248 = vmatpush1.bf16.msra.mxu0 %v108
    %249 = vmatprep.subr.bf16.mxu0 0
    %250 = vmatpush2.bf16.msra.mxu0 0
    %251 = vmatprep.subr.bf16.mxu0 0
    %252 = vmatpush2.bf16.msra.mxu0 0
    %253 = vmatprep.subr.bf16.mxu0 0
    %254 = vmatpush2.bf16.msra.mxu0 0
    %255 = vmatprep.subr.bf16.mxu0 0
    %256 = vmatpush2.bf16.msra.mxu0 0
    %257 = vmatprep.subr.bf16.mxu0 0
    %258 = vmatpush2.bf16.msra.mxu0 0
    %259 = vmatprep.subr.bf16.mxu0 0
    %260 = vmatpush2.bf16.msra.mxu0 0
    %261 = vmatprep.subr.bf16.mxu0 0
    %262 = vmatpush2.bf16.msra.mxu0 0
    %263 = vmatprep.subr.bf16.mxu0 0
    %264 = vmatpush2.bf16.msra.mxu0 0
    %265 = vmatprep.mubr.bf16.mxu0 0
    %266 = vmatmul.mubr.bf16.gmra.mxu0 %v122
    %v267 = vpop.f32.mrf.mxu0
    %v268 = vadd.f32 %v53, %v267
    %v269 = vpop.f32.mrf.mxu0
    %v270 = vadd.f32 %v53, %v269
    %v271 = vpop.f32.mrf.mxu0
    %v272 = vadd.f32 %v58, %v271
    %v273 = vpop.f32.mrf.mxu0
    %v274 = vadd.f32 %v58, %v273
    %275 = vmatprep.mubr.bf16.mxu0 0
    %276 = vmatmul.mubr.bf16.gmra.mxu0 %v125
    %v277 = vpop.f32.mrf.mxu0
    %v278 = vadd.f32 %v63, %v277
    %v279 = vpop.f32.mrf.mxu0
    %v280 = vadd.f32 %v63, %v279
    %v281 = vpop.f32.mrf.mxu0
    %v282 = vadd.f32 %v68, %v281
    %v283 = vpop.f32.mrf.mxu0
    %v284 = vadd.f32 %v68, %v283
    %285 = vdwg.mxu0
    %286 = vmatprep.subr.bf16.mxu0 0
    %287 = vmatpush1.bf16.msra.mxu0 0
    %288 = vmatprep.subr.bf16.mxu0 0
    %289 = vmatpush1.bf16.msra.mxu0 0
    %290 = vmatprep.subr.bf16.mxu0 0
    %291 = vmatpush1.bf16.msra.mxu0 0
    %292 = vmatprep.subr.bf16.mxu0 0
    %293 = vmatpush1.bf16.msra.mxu0 0
    %294 = vmatprep.subr.bf16.mxu0 0
    %295 = vmatpush1.bf16.msra.mxu0 0
    %296 = vmatprep.subr.bf16.mxu0 0
    %297 = vmatpush1.bf16.msra.mxu0 0
    %298 = vmatprep.subr.bf16.mxu0 0
    %299 = vmatpush1.bf16.msra.mxu0 0
    %300 = vmatprep.subr.bf16.mxu0 %v111
    %301 = vmatpush1.bf16.msra.mxu0 %v110
    %302 = vmatprep.subr.bf16.mxu0 0
    %303 = vmatpush2.bf16.msra.mxu0 0
    %304 = vmatprep.subr.bf16.mxu0 0
    %305 = vmatpush2.bf16.msra.mxu0 0
    %306 = vmatprep.subr.bf16.mxu0 0
    %307 = vmatpush2.bf16.msra.mxu0 0
    %308 = vmatprep.subr.bf16.mxu0 0
    %309 = vmatpush2.bf16.msra.mxu0 0
    %310 = vmatprep.subr.bf16.mxu0 0
    %311 = vmatpush2.bf16.msra.mxu0 0
    %312 = vmatprep.subr.bf16.mxu0 0
    %313 = vmatpush2.bf16.msra.mxu0 0
    %314 = vmatprep.subr.bf16.mxu0 0
    %315 = vmatpush2.bf16.msra.mxu0 0
    %316 = vmatprep.subr.bf16.mxu0 0
    %317 = vmatpush2.bf16.msra.mxu0 0
    %318 = vmatprep.mubr.bf16.mxu0 0
    %319 = vmatmul.mubr.bf16.gmra.mxu0 %v122
    %v320 = vpop.f32.mrf.mxu0
    %v321 = vadd.f32 %v53, %v320
    %v322 = vpop.f32.mrf.mxu0
    %v323 = vadd.f32 %v53, %v322
    %v324 = vpop.f32.mrf.mxu0
    %v325 = vadd.f32 %v58, %v324
    %v326 = vpop.f32.mrf.mxu0
    %v327 = vadd.f32 %v58, %v326
    %328 = vmatprep.mubr.bf16.mxu0 0
    %329 = vmatmul.mubr.bf16.gmra.mxu0 %v125
    %v330 = vpop.f32.mrf.mxu0
    %v331 = vadd.f32 %v63, %v330
    %v332 = vpop.f32.mrf.mxu0
    %v333 = vadd.f32 %v63, %v332
    %v334 = vpop.f32.mrf.mxu0
    %v335 = vadd.f32 %v68, %v334
    %v336 = vpop.f32.mrf.mxu0
    %v337 = vadd.f32 %v68, %v336
    %338 = vdwg.mxu0
    %v339 = vmax.f32 %v162, 0.0
    %v340 = vmax.f32 %v164, 0.0
    %v341 = vmax.f32 %v215, 0.0
    %v342 = vmax.f32 %v217, 0.0
    %v343 = vmax.f32 %v268, 0.0
    %v344 = vmax.f32 %v270, 0.0
    %v345 = vmax.f32 %v321, 0.0
    %v346 = vmax.f32 %v323, 0.0
    %v347 = vmax.f32 %v166, 0.0
    %v348 = vmax.f32 %v168, 0.0
    %v349 = vmax.f32 %v219, 0.0
    %v350 = vmax.f32 %v221, 0.0
    %v351 = vmax.f32 %v272, 0.0
    %v352 = vmax.f32 %v274, 0.0
    %v353 = vmax.f32 %v325, 0.0
    %v354 = vmax.f32 %v327, 0.0
    %v355 = vmax.f32 %v172, 0.0
    %v356 = vmax.f32 %v174, 0.0
    %v357 = vmax.f32 %v225, 0.0
    %v358 = vmax.f32 %v227, 0.0
    %v359 = vmax.f32 %v278, 0.0
    %v360 = vmax.f32 %v280, 0.0
    %v361 = vmax.f32 %v331, 0.0
    %v362 = vmax.f32 %v333, 0.0
    %v363 = vmax.f32 %v176, 0.0
    %v364 = vmax.f32 %v178, 0.0
    %v365 = vmax.f32 %v229, 0.0
    %v366 = vmax.f32 %v231, 0.0
    %v367 = vmax.f32 %v282, 0.0
    %v368 = vmax.f32 %v284, 0.0
    %v369 = vmax.f32 %v335, 0.0
    %v370 = vmax.f32 %v337, 0.0
    %v371 = vld [vmem:[%s3] sm:$0xf]
    %v372 = vld [vmem:[%s3 + $0x4] sm:$0xf]
    %v373 = vpack.c.bf16 %v347, %v339
    %v374 = vpack.c.bf16 %v348, %v340
    %v375 = vpack.c.bf16 %v349, %v341
    %v376 = vpack.c.bf16 %v350, %v342
    %v377 = vpack.c.bf16 %v351, %v343
    %v378 = vpack.c.bf16 %v352, %v344
    %v379 = vpack.c.bf16 %v353, %v345
    %v380 = vpack.c.bf16 %v354, %v346
    %v381 = vpack.c.bf16 %v363, %v355
    %v382 = vpack.c.bf16 %v364, %v356
    %v383 = vpack.c.bf16 %v365, %v357
    %v384 = vpack.c.bf16 %v366, %v358
    %v385 = vpack.c.bf16 %v367, %v359
    %v386 = vpack.c.bf16 %v368, %v360
    %v387 = vpack.c.bf16 %v369, %v361
    %v388 = vpack.c.bf16 %v370, %v362
    %v389 = vld [vmem:[%s4] sm:$0xff]
    %v390 = vld [vmem:[%s4 + $0x8] sm:$0xff]
    %392 = vset.pattern.permute.xlu0 0
    %393 = vperm.xlu0 %392, %v389
    %v394 = vpop.permute.xlu0 %393
    %397 = vset.pattern.permute.xlu0 0
    %398 = vperm.xlu0 %397, %v390
    %v399 = vpop.permute.xlu0 %398
    %v403 = vunpack.c.l.b16 %v371
    %v404 = vunpack.c.l.b16 %v372
    %v405 = vpack.c.b16 %v404, %v403
    %vm406 = vcmask 261120
    %v408 = vsel %vm406, %v405, 0
    %410 = vmatprep.subr.bf16.mxu0 0
    %411 = vmatpush1.bf16.msra.mxu0 0
    %412 = vmatprep.subr.bf16.mxu0 0
    %413 = vmatpush1.bf16.msra.mxu0 0
    %414 = vmatprep.subr.bf16.mxu0 0
    %415 = vmatpush1.bf16.msra.mxu0 0
    %416 = vmatprep.subr.bf16.mxu0 0
    %417 = vmatpush1.bf16.msra.mxu0 0
    %418 = vmatprep.subr.bf16.mxu0 0
    %419 = vmatpush1.bf16.msra.mxu0 0
    %420 = vmatprep.subr.bf16.mxu0 0
    %421 = vmatpush1.bf16.msra.mxu0 0
    %422 = vmatprep.subr.bf16.mxu0 %v382
    %423 = vmatpush1.bf16.msra.mxu0 %v381
    %424 = vmatprep.subr.bf16.mxu0 %v374
    %425 = vmatpush1.bf16.msra.mxu0 %v373
    %426 = vmatprep.subr.bf16.mxu0 0
    %427 = vmatpush2.bf16.msra.mxu0 0
    %428 = vmatprep.subr.bf16.mxu0 0
    %429 = vmatpush2.bf16.msra.mxu0 0
    %430 = vmatprep.subr.bf16.mxu0 0
    %431 = vmatpush2.bf16.msra.mxu0 0
    %432 = vmatprep.subr.bf16.mxu0 0
    %433 = vmatpush2.bf16.msra.mxu0 0
    %434 = vmatprep.subr.bf16.mxu0 0
    %435 = vmatpush2.bf16.msra.mxu0 0
    %436 = vmatprep.subr.bf16.mxu0 0
    %437 = vmatpush2.bf16.msra.mxu0 0
    %438 = vmatprep.subr.bf16.mxu0 0
    %439 = vmatpush2.bf16.msra.mxu0 0
    %440 = vmatprep.subr.bf16.mxu0 0
    %441 = vmatpush2.bf16.msra.mxu0 0
    %442 = vmatprep.mubr.bf16.mxu0 0
    %443 = vmatmul.mubr.bf16.gmra.mxu0 %v408
    %v444 = vpop.f32.mrf.mxu0
    %v445 = vadd.f32 %v394, %v444
    %v446 = vpop.f32.mrf.mxu0
    %v447 = vadd.f32 %v394, %v446
    %v448 = vpop.f32.mrf.mxu0
    %v449 = vadd.f32 %v399, %v448
    %v450 = vpop.f32.mrf.mxu0
    %v451 = vadd.f32 %v399, %v450
    %452 = vdwg.mxu0
    %453 = vmatprep.subr.bf16.mxu0 0
    %454 = vmatpush1.bf16.msra.mxu0 0
    %455 = vmatprep.subr.bf16.mxu0 0
    %456 = vmatpush1.bf16.msra.mxu0 0
    %457 = vmatprep.subr.bf16.mxu0 0
    %458 = vmatpush1.bf16.msra.mxu0 0
    %459 = vmatprep.subr.bf16.mxu0 0
    %460 = vmatpush1.bf16.msra.mxu0 0
    %461 = vmatprep.subr.bf16.mxu0 0
    %462 = vmatpush1.bf16.msra.mxu0 0
    %463 = vmatprep.subr.bf16.mxu0 0
    %464 = vmatpush1.bf16.msra.mxu0 0
    %465 = vmatprep.subr.bf16.mxu0 %v384
    %466 = vmatpush1.bf16.msra.mxu0 %v383
    %467 = vmatprep.subr.bf16.mxu0 %v376
    %468 = vmatpush1.bf16.msra.mxu0 %v375
    %469 = vmatprep.subr.bf16.mxu0 0
    %470 = vmatpush2.bf16.msra.mxu0 0
    %471 = vmatprep.subr.bf16.mxu0 0
    %472 = vmatpush2.bf16.msra.mxu0 0
    %473 = vmatprep.subr.bf16.mxu0 0
    %474 = vmatpush2.bf16.msra.mxu0 0
    %475 = vmatprep.subr.bf16.mxu0 0
    %476 = vmatpush2.bf16.msra.mxu0 0
    %477 = vmatprep.subr.bf16.mxu0 0
    %478 = vmatpush2.bf16.msra.mxu0 0
    %479 = vmatprep.subr.bf16.mxu0 0
    %480 = vmatpush2.bf16.msra.mxu0 0
    %481 = vmatprep.subr.bf16.mxu0 0
    %482 = vmatpush2.bf16.msra.mxu0 0
    %483 = vmatprep.subr.bf16.mxu0 0
    %484 = vmatpush2.bf16.msra.mxu0 0
    %485 = vmatprep.mubr.bf16.mxu0 0
    %486 = vmatmul.mubr.bf16.gmra.mxu0 %v408
    %v487 = vpop.f32.mrf.mxu0
    %v488 = vadd.f32 %v394, %v487
    %v489 = vpop.f32.mrf.mxu0
    %v490 = vadd.f32 %v394, %v489
    %v491 = vpop.f32.mrf.mxu0
    %v492 = vadd.f32 %v399, %v491
    %v493 = vpop.f32.mrf.mxu0
    %v494 = vadd.f32 %v399, %v493
    %495 = vdwg.mxu0
    %496 = vmatprep.subr.bf16.mxu0 0
    %497 = vmatpush1.bf16.msra.mxu0 0
    %498 = vmatprep.subr.bf16.mxu0 0
    %499 = vmatpush1.bf16.msra.mxu0 0
    %500 = vmatprep.subr.bf16.mxu0 0
    %501 = vmatpush1.bf16.msra.mxu0 0
    %502 = vmatprep.subr.bf16.mxu0 0
    %503 = vmatpush1.bf16.msra.mxu0 0
    %504 = vmatprep.subr.bf16.mxu0 0
    %505 = vmatpush1.bf16.msra.mxu0 0
    %506 = vmatprep.subr.bf16.mxu0 0
    %507 = vmatpush1.bf16.msra.mxu0 0
    %508 = vmatprep.subr.bf16.mxu0 %v386
    %509 = vmatpush1.bf16.msra.mxu0 %v385
    %510 = vmatprep.subr.bf16.mxu0 %v378
    %511 = vmatpush1.bf16.msra.mxu0 %v377
    %512 = vmatprep.subr.bf16.mxu0 0
    %513 = vmatpush2.bf16.msra.mxu0 0
    %514 = vmatprep.subr.bf16.mxu0 0
    %515 = vmatpush2.bf16.msra.mxu0 0
    %516 = vmatprep.subr.bf16.mxu0 0
    %517 = vmatpush2.bf16.msra.mxu0 0
    %518 = vmatprep.subr.bf16.mxu0 0
    %519 = vmatpush2.bf16.msra.mxu0 0
    %520 = vmatprep.subr.bf16.mxu0 0
    %521 = vmatpush2.bf16.msra.mxu0 0
    %522 = vmatprep.subr.bf16.mxu0 0
    %523 = vmatpush2.bf16.msra.mxu0 0
    %524 = vmatprep.subr.bf16.mxu0 0
    %525 = vmatpush2.bf16.msra.mxu0 0
    %526 = vmatprep.subr.bf16.mxu0 0
    %527 = vmatpush2.bf16.msra.mxu0 0
    %528 = vmatprep.mubr.bf16.mxu0 0
    %529 = vmatmul.mubr.bf16.gmra.mxu0 %v408
    %v530 = vpop.f32.mrf.mxu0
    %v531 = vadd.f32 %v394, %v530
    %v532 = vpop.f32.mrf.mxu0
    %v533 = vadd.f32 %v394, %v532
    %v534 = vpop.f32.mrf.mxu0
    %v535 = vadd.f32 %v399, %v534
    %v536 = vpop.f32.mrf.mxu0
    %v537 = vadd.f32 %v399, %v536
    %538 = vdwg.mxu0
    %539 = vmatprep.subr.bf16.mxu0 0
    %540 = vmatpush1.bf16.msra.mxu0 0
    %541 = vmatprep.subr.bf16.mxu0 0
    %542 = vmatpush1.bf16.msra.mxu0 0
    %543 = vmatprep.subr.bf16.mxu0 0
    %544 = vmatpush1.bf16.msra.mxu0 0
    %545 = vmatprep.subr.bf16.mxu0 0
    %546 = vmatpush1.bf16.msra.mxu0 0
    %547 = vmatprep.subr.bf16.mxu0 0
    %548 = vmatpush1.bf16.msra.mxu0 0
    %549 = vmatprep.subr.bf16.mxu0 0
    %550 = vmatpush1.bf16.msra.mxu0 0
    %551 = vmatprep.subr.bf16.mxu0 %v388
    %552 = vmatpush1.bf16.msra.mxu0 %v387
    %553 = vmatprep.subr.bf16.mxu0 %v380
    %554 = vmatpush1.bf16.msra.mxu0 %v379
    %555 = vmatprep.subr.bf16.mxu0 0
    %556 = vmatpush2.bf16.msra.mxu0 0
    %557 = vmatprep.subr.bf16.mxu0 0
    %558 = vmatpush2.bf16.msra.mxu0 0
    %559 = vmatprep.subr.bf16.mxu0 0
    %560 = vmatpush2.bf16.msra.mxu0 0
    %561 = vmatprep.subr.bf16.mxu0 0
    %562 = vmatpush2.bf16.msra.mxu0 0
    %563 = vmatprep.subr.bf16.mxu0 0
    %564 = vmatpush2.bf16.msra.mxu0 0
    %565 = vmatprep.subr.bf16.mxu0 0
    %566 = vmatpush2.bf16.msra.mxu0 0
    %567 = vmatprep.subr.bf16.mxu0 0
    %568 = vmatpush2.bf16.msra.mxu0 0
    %569 = vmatprep.subr.bf16.mxu0 0
    %570 = vmatpush2.bf16.msra.mxu0 0
    %571 = vmatprep.mubr.bf16.mxu0 0
    %572 = vmatmul.mubr.bf16.gmra.mxu0 %v408
    %v573 = vpop.f32.mrf.mxu0
    %v574 = vadd.f32 %v394, %v573
    %v575 = vpop.f32.mrf.mxu0
    %v576 = vadd.f32 %v394, %v575
    %v577 = vpop.f32.mrf.mxu0
    %v578 = vadd.f32 %v399, %v577
    %v579 = vpop.f32.mrf.mxu0
    %v580 = vadd.f32 %v399, %v579
    %581 = vdwg.mxu0
    %v582 = vmax.f32 %v445, 0.0
    %v583 = vmax.f32 %v447, 0.0
    %v584 = vmax.f32 %v488, 0.0
    %v585 = vmax.f32 %v490, 0.0
    %v586 = vmax.f32 %v531, 0.0
    %v587 = vmax.f32 %v533, 0.0
    %v588 = vmax.f32 %v574, 0.0
    %v589 = vmax.f32 %v576, 0.0
    %v590 = vmax.f32 %v449, 0.0
    %v591 = vmax.f32 %v451, 0.0
    %v592 = vmax.f32 %v492, 0.0
    %v593 = vmax.f32 %v494, 0.0
    %v594 = vmax.f32 %v535, 0.0
    %v595 = vmax.f32 %v537, 0.0
    %v596 = vmax.f32 %v578, 0.0
    %v597 = vmax.f32 %v580, 0.0
    %v598 = vld [vmem:[%s5] sm:$0xf]
    %v599 = vpack.c.bf16 %v590, %v582
    %v600 = vpack.c.bf16 %v591, %v583
    %v601 = vpack.c.bf16 %v592, %v584
    %v602 = vpack.c.bf16 %v593, %v585
    %v603 = vpack.c.bf16 %v594, %v586
    %v604 = vpack.c.bf16 %v595, %v587
    %v605 = vpack.c.bf16 %v596, %v588
    %v606 = vpack.c.bf16 %v597, %v589
    %v607 = vld [vmem:[%s6] sm:$0xff]
    %609 = vset.pattern.permute.xlu0 0
    %610 = vperm.xlu0 %609, %v607
    %v611 = vpop.permute.xlu0 %610
    %v614 = vsel %vm120, %v598, 0
    %616 = vmatprep.subr.bf16.mxu0 0
    %617 = vmatpush1.bf16.msra.mxu0 0
    %618 = vmatprep.subr.bf16.mxu0 0
    %619 = vmatpush1.bf16.msra.mxu0 0
    %620 = vmatprep.subr.bf16.mxu0 0
    %621 = vmatpush1.bf16.msra.mxu0 0
    %622 = vmatprep.subr.bf16.mxu0 0
    %623 = vmatpush1.bf16.msra.mxu0 0
    %624 = vmatprep.subr.bf16.mxu0 0
    %625 = vmatpush1.bf16.msra.mxu0 0
    %626 = vmatprep.subr.bf16.mxu0 0
    %627 = vmatpush1.bf16.msra.mxu0 0
    %628 = vmatprep.subr.bf16.mxu0 0
    %629 = vmatpush1.bf16.msra.mxu0 0
    %630 = vmatprep.subr.bf16.mxu0 %v600
    %631 = vmatpush1.bf16.msra.mxu0 %v599
    %632 = vmatprep.subr.bf16.mxu0 0
    %633 = vmatpush2.bf16.msra.mxu0 0
    %634 = vmatprep.subr.bf16.mxu0 0
    %635 = vmatpush2.bf16.msra.mxu0 0
    %636 = vmatprep.subr.bf16.mxu0 0
    %637 = vmatpush2.bf16.msra.mxu0 0
    %638 = vmatprep.subr.bf16.mxu0 0
    %639 = vmatpush2.bf16.msra.mxu0 0
    %640 = vmatprep.subr.bf16.mxu0 0
    %641 = vmatpush2.bf16.msra.mxu0 0
    %642 = vmatprep.subr.bf16.mxu0 0
    %643 = vmatpush2.bf16.msra.mxu0 0
    %644 = vmatprep.subr.bf16.mxu0 0
    %645 = vmatpush2.bf16.msra.mxu0 0
    %646 = vmatprep.subr.bf16.mxu0 0
    %647 = vmatpush2.bf16.msra.mxu0 0
    %648 = vmatprep.mubr.bf16.mxu0 0
    %649 = vmatmul.mubr.bf16.gmra.mxu0 %v614
    %v650 = vpop.f32.mrf.mxu0
    %v651 = vadd.f32 %v611, %v650
    %v652 = vpop.f32.mrf.mxu0
    %v653 = vadd.f32 %v611, %v652
    %v654 = vpop.f32.mrf.mxu0
    %v655 = vpop.f32.mrf.mxu0
    %656 = vdwg.mxu0
    %657 = vmatprep.subr.bf16.mxu0 0
    %658 = vmatpush1.bf16.msra.mxu0 0
    %659 = vmatprep.subr.bf16.mxu0 0
    %660 = vmatpush1.bf16.msra.mxu0 0
    %661 = vmatprep.subr.bf16.mxu0 0
    %662 = vmatpush1.bf16.msra.mxu0 0
    %663 = vmatprep.subr.bf16.mxu0 0
    %664 = vmatpush1.bf16.msra.mxu0 0
    %665 = vmatprep.subr.bf16.mxu0 0
    %666 = vmatpush1.bf16.msra.mxu0 0
    %667 = vmatprep.subr.bf16.mxu0 0
    %668 = vmatpush1.bf16.msra.mxu0 0
    %669 = vmatprep.subr.bf16.mxu0 0
    %670 = vmatpush1.bf16.msra.mxu0 0
    %671 = vmatprep.subr.bf16.mxu0 %v602
    %672 = vmatpush1.bf16.msra.mxu0 %v601
    %673 = vmatprep.subr.bf16.mxu0 0
    %674 = vmatpush2.bf16.msra.mxu0 0
    %675 = vmatprep.subr.bf16.mxu0 0
    %676 = vmatpush2.bf16.msra.mxu0 0
    %677 = vmatprep.subr.bf16.mxu0 0
    %678 = vmatpush2.bf16.msra.mxu0 0
    %679 = vmatprep.subr.bf16.mxu0 0
    %680 = vmatpush2.bf16.msra.mxu0 0
    %681 = vmatprep.subr.bf16.mxu0 0
    %682 = vmatpush2.bf16.msra.mxu0 0
    %683 = vmatprep.subr.bf16.mxu0 0
    %684 = vmatpush2.bf16.msra.mxu0 0
    %685 = vmatprep.subr.bf16.mxu0 0
    %686 = vmatpush2.bf16.msra.mxu0 0
    %687 = vmatprep.subr.bf16.mxu0 0
    %688 = vmatpush2.bf16.msra.mxu0 0
    %689 = vmatprep.mubr.bf16.mxu0 0
    %690 = vmatmul.mubr.bf16.gmra.mxu0 %v614
    %v691 = vpop.f32.mrf.mxu0
    %v692 = vadd.f32 %v611, %v691
    %v693 = vpop.f32.mrf.mxu0
    %v694 = vadd.f32 %v611, %v693
    %v695 = vpop.f32.mrf.mxu0
    %v696 = vpop.f32.mrf.mxu0
    %697 = vdwg.mxu0
    %698 = vmatprep.subr.bf16.mxu0 0
    %699 = vmatpush1.bf16.msra.mxu0 0
    %700 = vmatprep.subr.bf16.mxu0 0
    %701 = vmatpush1.bf16.msra.mxu0 0
    %702 = vmatprep.subr.bf16.mxu0 0
    %703 = vmatpush1.bf16.msra.mxu0 0
    %704 = vmatprep.subr.bf16.mxu0 0
    %705 = vmatpush1.bf16.msra.mxu0 0
    %706 = vmatprep.subr.bf16.mxu0 0
    %707 = vmatpush1.bf16.msra.mxu0 0
    %708 = vmatprep.subr.bf16.mxu0 0
    %709 = vmatpush1.bf16.msra.mxu0 0
    %710 = vmatprep.subr.bf16.mxu0 0
    %711 = vmatpush1.bf16.msra.mxu0 0
    %712 = vmatprep.subr.bf16.mxu0 %v604
    %713 = vmatpush1.bf16.msra.mxu0 %v603
    %714 = vmatprep.subr.bf16.mxu0 0
    %715 = vmatpush2.bf16.msra.mxu0 0
    %716 = vmatprep.subr.bf16.mxu0 0
    %717 = vmatpush2.bf16.msra.mxu0 0
    %718 = vmatprep.subr.bf16.mxu0 0
    %719 = vmatpush2.bf16.msra.mxu0 0
    %720 = vmatprep.subr.bf16.mxu0 0
    %721 = vmatpush2.bf16.msra.mxu0 0
    %722 = vmatprep.subr.bf16.mxu0 0
    %723 = vmatpush2.bf16.msra.mxu0 0
    %724 = vmatprep.subr.bf16.mxu0 0
    %725 = vmatpush2.bf16.msra.mxu0 0
    %726 = vmatprep.subr.bf16.mxu0 0
    %727 = vmatpush2.bf16.msra.mxu0 0
    %728 = vmatprep.subr.bf16.mxu0 0
    %729 = vmatpush2.bf16.msra.mxu0 0
    %730 = vmatprep.mubr.bf16.mxu0 0
    %731 = vmatmul.mubr.bf16.gmra.mxu0 %v614
    %v732 = vpop.f32.mrf.mxu0
    %v733 = vadd.f32 %v611, %v732
    %v734 = vpop.f32.mrf.mxu0
    %v735 = vadd.f32 %v611, %v734
    %v736 = vpop.f32.mrf.mxu0
    %v737 = vpop.f32.mrf.mxu0
    %738 = vdwg.mxu0
    %739 = vmatprep.subr.bf16.mxu0 0
    %740 = vmatpush1.bf16.msra.mxu0 0
    %741 = vmatprep.subr.bf16.mxu0 0
    %742 = vmatpush1.bf16.msra.mxu0 0
    %743 = vmatprep.subr.bf16.mxu0 0
    %744 = vmatpush1.bf16.msra.mxu0 0
    %745 = vmatprep.subr.bf16.mxu0 0
    %746 = vmatpush1.bf16.msra.mxu0 0
    %747 = vmatprep.subr.bf16.mxu0 0
    %748 = vmatpush1.bf16.msra.mxu0 0
    %749 = vmatprep.subr.bf16.mxu0 0
    %750 = vmatpush1.bf16.msra.mxu0 0
    %751 = vmatprep.subr.bf16.mxu0 0
    %752 = vmatpush1.bf16.msra.mxu0 0
    %753 = vmatprep.subr.bf16.mxu0 %v606
    %754 = vmatpush1.bf16.msra.mxu0 %v605
    %755 = vmatprep.subr.bf16.mxu0 0
    %756 = vmatpush2.bf16.msra.mxu0 0
    %757 = vmatprep.subr.bf16.mxu0 0
    %758 = vmatpush2.bf16.msra.mxu0 0
    %759 = vmatprep.subr.bf16.mxu0 0
    %760 = vmatpush2.bf16.msra.mxu0 0
    %761 = vmatprep.subr.bf16.mxu0 0
    %762 = vmatpush2.bf16.msra.mxu0 0
    %763 = vmatprep.subr.bf16.mxu0 0
    %764 = vmatpush2.bf16.msra.mxu0 0
    %765 = vmatprep.subr.bf16.mxu0 0
    %766 = vmatpush2.bf16.msra.mxu0 0
    %767 = vmatprep.subr.bf16.mxu0 0
    %768 = vmatpush2.bf16.msra.mxu0 0
    %769 = vmatprep.subr.bf16.mxu0 0
    %770 = vmatpush2.bf16.msra.mxu0 0
    %771 = vmatprep.mubr.bf16.mxu0 0
    %772 = vmatmul.mubr.bf16.gmra.mxu0 %v614
    %v773 = vpop.f32.mrf.mxu0
    %v774 = vadd.f32 %v611, %v773
    %v775 = vpop.f32.mrf.mxu0
    %v776 = vadd.f32 %v611, %v775
    %v777 = vpop.f32.mrf.mxu0
    %v778 = vpop.f32.mrf.mxu0
    %779 = vdwg.mxu0
    %v780 = vmax.f32 %v651, 0.0
    %v781 = vmax.f32 %v653, 0.0
    %v782 = vmax.f32 %v692, 0.0
    %v783 = vmax.f32 %v694, 0.0
    %v784 = vmax.f32 %v733, 0.0
    %v785 = vmax.f32 %v735, 0.0
    %v786 = vmax.f32 %v774, 0.0
    %v787 = vmax.f32 %v776, 0.0
    %v788 = vld [vmem:[%s7] sm:$0x1]
    %v789 = vpack.c.bf16 %v780, %v780
    %v790 = vpack.c.bf16 %v781, %v781
    %v791 = vpack.c.bf16 %v782, %v782
    %v792 = vpack.c.bf16 %v783, %v783
    %v793 = vpack.c.bf16 %v784, %v784
    %v794 = vpack.c.bf16 %v785, %v785
    %v795 = vpack.c.bf16 %v786, %v786
    %v796 = vpack.c.bf16 %v787, %v787
    %v797 = vld [vmem:[%s8] sm:$0x3]
    %799 = vset.pattern.permute.xlu0 0
    %800 = vperm.xlu0 %799, %v797
    %v801 = vpop.permute.xlu0 %800
    %vm803 = vcmask 64512
    %v805 = vsel %vm803, %v788, 0
    %vm807 = vcmask 1043456
    %v809 = vsel %vm807, %v789, 0
    %v812 = vsel %vm807, %v790, 0
    %v815 = vsel %vm807, %v791, 0
    %v818 = vsel %vm807, %v792, 0
    %v821 = vsel %vm807, %v793, 0
    %v824 = vsel %vm807, %v794, 0
    %v827 = vsel %vm807, %v795, 0
    %v830 = vsel %vm807, %v796, 0
    %832 = vmatprep.subr.bf16.mxu0 0
    %833 = vmatpush1.bf16.msra.mxu0 0
    %834 = vmatprep.subr.bf16.mxu0 0
    %835 = vmatpush1.bf16.msra.mxu0 0
    %836 = vmatprep.subr.bf16.mxu0 0
    %837 = vmatpush1.bf16.msra.mxu0 0
    %838 = vmatprep.subr.bf16.mxu0 0
    %839 = vmatpush1.bf16.msra.mxu0 0
    %840 = vmatprep.subr.bf16.mxu0 0
    %841 = vmatpush1.bf16.msra.mxu0 0
    %842 = vmatprep.subr.bf16.mxu0 0
    %843 = vmatpush1.bf16.msra.mxu0 0
    %844 = vmatprep.subr.bf16.mxu0 0
    %845 = vmatpush1.bf16.msra.mxu0 0
    %846 = vmatprep.subr.bf16.mxu0 %v812
    %847 = vmatpush1.bf16.msra.mxu0 %v809
    %848 = vmatprep.subr.bf16.mxu0 0
    %849 = vmatpush2.bf16.msra.mxu0 0
    %850 = vmatprep.subr.bf16.mxu0 0
    %851 = vmatpush2.bf16.msra.mxu0 0
    %852 = vmatprep.subr.bf16.mxu0 0
    %853 = vmatpush2.bf16.msra.mxu0 0
    %854 = vmatprep.subr.bf16.mxu0 0
    %855 = vmatpush2.bf16.msra.mxu0 0
    %856 = vmatprep.subr.bf16.mxu0 0
    %857 = vmatpush2.bf16.msra.mxu0 0
    %858 = vmatprep.subr.bf16.mxu0 0
    %859 = vmatpush2.bf16.msra.mxu0 0
    %860 = vmatprep.subr.bf16.mxu0 0
    %861 = vmatpush2.bf16.msra.mxu0 0
    %862 = vmatprep.subr.bf16.mxu0 0
    %863 = vmatpush2.bf16.msra.mxu0 0
    %864 = vmatprep.mubr.bf16.mxu0 0
    %865 = vmatmul.mubr.bf16.gmra.mxu0 %v805
    %v866 = vpop.f32.mrf.mxu0
    %v867 = vadd.f32 %v801, %v866
    %v868 = vpop.f32.mrf.mxu0
    %v869 = vadd.f32 %v801, %v868
    %v870 = vpop.f32.mrf.mxu0
    %v871 = vpop.f32.mrf.mxu0
    %872 = vdwg.mxu0
    %873 = vmatprep.subr.bf16.mxu0 0
    %874 = vmatpush1.bf16.msra.mxu0 0
    %875 = vmatprep.subr.bf16.mxu0 0
    %876 = vmatpush1.bf16.msra.mxu0 0
    %877 = vmatprep.subr.bf16.mxu0 0
    %878 = vmatpush1.bf16.msra.mxu0 0
    %879 = vmatprep.subr.bf16.mxu0 0
    %880 = vmatpush1.bf16.msra.mxu0 0
    %881 = vmatprep.subr.bf16.mxu0 0
    %882 = vmatpush1.bf16.msra.mxu0 0
    %883 = vmatprep.subr.bf16.mxu0 0
    %884 = vmatpush1.bf16.msra.mxu0 0
    %885 = vmatprep.subr.bf16.mxu0 0
    %886 = vmatpush1.bf16.msra.mxu0 0
    %887 = vmatprep.subr.bf16.mxu0 %v818
    %888 = vmatpush1.bf16.msra.mxu0 %v815
    %889 = vmatprep.subr.bf16.mxu0 0
    %890 = vmatpush2.bf16.msra.mxu0 0
    %891 = vmatprep.subr.bf16.mxu0 0
    %892 = vmatpush2.bf16.msra.mxu0 0
    %893 = vmatprep.subr.bf16.mxu0 0
    %894 = vmatpush2.bf16.msra.mxu0 0
    %895 = vmatprep.subr.bf16.mxu0 0
    %896 = vmatpush2.bf16.msra.mxu0 0
    %897 = vmatprep.subr.bf16.mxu0 0
    %898 = vmatpush2.bf16.msra.mxu0 0
    %899 = vmatprep.subr.bf16.mxu0 0
    %900 = vmatpush2.bf16.msra.mxu0 0
    %901 = vmatprep.subr.bf16.mxu0 0
    %902 = vmatpush2.bf16.msra.mxu0 0
    %903 = vmatprep.subr.bf16.mxu0 0
    %904 = vmatpush2.bf16.msra.mxu0 0
    %905 = vmatprep.mubr.bf16.mxu0 0
    %906 = vmatmul.mubr.bf16.gmra.mxu0 %v805
    %v907 = vpop.f32.mrf.mxu0
    %v908 = vadd.f32 %v801, %v907
    %v909 = vpop.f32.mrf.mxu0
    %v910 = vadd.f32 %v801, %v909
    %v911 = vpop.f32.mrf.mxu0
    %v912 = vpop.f32.mrf.mxu0
    %913 = vdwg.mxu0
    %914 = vmatprep.subr.bf16.mxu0 0
    %915 = vmatpush1.bf16.msra.mxu0 0
    %916 = vmatprep.subr.bf16.mxu0 0
    %917 = vmatpush1.bf16.msra.mxu0 0
    %918 = vmatprep.subr.bf16.mxu0 0
    %919 = vmatpush1.bf16.msra.mxu0 0
    %920 = vmatprep.subr.bf16.mxu0 0
    %921 = vmatpush1.bf16.msra.mxu0 0
    %922 = vmatprep.subr.bf16.mxu0 0
    %923 = vmatpush1.bf16.msra.mxu0 0
    %924 = vmatprep.subr.bf16.mxu0 0
    %925 = vmatpush1.bf16.msra.mxu0 0
    %926 = vmatprep.subr.bf16.mxu0 0
    %927 = vmatpush1.bf16.msra.mxu0 0
    %928 = vmatprep.subr.bf16.mxu0 %v824
    %929 = vmatpush1.bf16.msra.mxu0 %v821
    %930 = vmatprep.subr.bf16.mxu0 0
    %931 = vmatpush2.bf16.msra.mxu0 0
    %932 = vmatprep.subr.bf16.mxu0 0
    %933 = vmatpush2.bf16.msra.mxu0 0
    %934 = vmatprep.subr.bf16.mxu0 0
    %935 = vmatpush2.bf16.msra.mxu0 0
    %936 = vmatprep.subr.bf16.mxu0 0
    %937 = vmatpush2.bf16.msra.mxu0 0
    %938 = vmatprep.subr.bf16.mxu0 0
    %939 = vmatpush2.bf16.msra.mxu0 0
    %940 = vmatprep.subr.bf16.mxu0 0
    %941 = vmatpush2.bf16.msra.mxu0 0
    %942 = vmatprep.subr.bf16.mxu0 0
    %943 = vmatpush2.bf16.msra.mxu0 0
    %944 = vmatprep.subr.bf16.mxu0 0
    %945 = vmatpush2.bf16.msra.mxu0 0
    %946 = vmatprep.mubr.bf16.mxu0 0
    %947 = vmatmul.mubr.bf16.gmra.mxu0 %v805
    %v948 = vpop.f32.mrf.mxu0
    %v949 = vadd.f32 %v801, %v948
    %v950 = vpop.f32.mrf.mxu0
    %v951 = vadd.f32 %v801, %v950
    %v952 = vpop.f32.mrf.mxu0
    %v953 = vpop.f32.mrf.mxu0
    %954 = vdwg.mxu0
    %955 = vmatprep.subr.bf16.mxu0 0
    %956 = vmatpush1.bf16.msra.mxu0 0
    %957 = vmatprep.subr.bf16.mxu0 0
    %958 = vmatpush1.bf16.msra.mxu0 0
    %959 = vmatprep.subr.bf16.mxu0 0
    %960 = vmatpush1.bf16.msra.mxu0 0
    %961 = vmatprep.subr.bf16.mxu0 0
    %962 = vmatpush1.bf16.msra.mxu0 0
    %963 = vmatprep.subr.bf16.mxu0 0
    %964 = vmatpush1.bf16.msra.mxu0 0
    %965 = vmatprep.subr.bf16.mxu0 0
    %966 = vmatpush1.bf16.msra.mxu0 0
    %967 = vmatprep.subr.bf16.mxu0 0
    %968 = vmatpush1.bf16.msra.mxu0 0
    %969 = vmatprep.subr.bf16.mxu0 %v830
    %970 = vmatpush1.bf16.msra.mxu0 %v827
    %971 = vmatprep.subr.bf16.mxu0 0
    %972 = vmatpush2.bf16.msra.mxu0 0
    %973 = vmatprep.subr.bf16.mxu0 0
    %974 = vmatpush2.bf16.msra.mxu0 0
    %975 = vmatprep.subr.bf16.mxu0 0
    %976 = vmatpush2.bf16.msra.mxu0 0
    %977 = vmatprep.subr.bf16.mxu0 0
    %978 = vmatpush2.bf16.msra.mxu0 0
    %979 = vmatprep.subr.bf16.mxu0 0
    %980 = vmatpush2.bf16.msra.mxu0 0
    %981 = vmatprep.subr.bf16.mxu0 0
    %982 = vmatpush2.bf16.msra.mxu0 0
    %983 = vmatprep.subr.bf16.mxu0 0
    %984 = vmatpush2.bf16.msra.mxu0 0
    %985 = vmatprep.subr.bf16.mxu0 0
    %986 = vmatpush2.bf16.msra.mxu0 0
    %987 = vmatprep.mubr.bf16.mxu0 0
    %988 = vmatmul.mubr.bf16.gmra.mxu0 %v805
    %v989 = vpop.f32.mrf.mxu0
    %v990 = vadd.f32 %v801, %v989
    %v991 = vpop.f32.mrf.mxu0
    %v992 = vadd.f32 %v801, %v991
    %v993 = vpop.f32.mrf.mxu0
    %v994 = vpop.f32.mrf.mxu0
    %995 = vdwg.mxu0
    %v1004 = vcombine.low %v867, %v869
    %v1005 = vcombine.low %v908, %v910
    %v1007 = vunpack.c.l.s4 1983009808
    %v1008 = vunpack.c.0.s8 %v1007
    %v1009 = vlaneseq
    %v1010 = vshrl.u32 %v1009, 7
    %v1011 = vsub.s32 %v1008, %v1010
    %v1012 = vrot.slane %v1004, %v1011
    %v1014 = vunpack.c.l.s4 1983009808
    %v1015 = vunpack.c.0.s8 %v1014
    %v1016 = vlaneseq
    %v1017 = vshrl.u32 %v1016, 7
    %v1018 = vsub.s32 %v1015, %v1017
    %v1019 = vrot.slane %v1005, %v1018
    %v1020 = vcombine.low %v1012, %v1019
    %v1021 = vcombine.low %v949, %v951
    %v1022 = vcombine.low %v990, %v992
    %v1024 = vunpack.c.l.s4 1983009808
    %v1025 = vunpack.c.0.s8 %v1024
    %v1026 = vlaneseq
    %v1027 = vshrl.u32 %v1026, 7
    %v1028 = vsub.s32 %v1025, %v1027
    %v1029 = vrot.slane %v1021, %v1028
    %v1031 = vunpack.c.l.s4 1983009808
    %v1032 = vunpack.c.0.s8 %v1031
    %v1033 = vlaneseq
    %v1034 = vshrl.u32 %v1033, 7
    %v1035 = vsub.s32 %v1032, %v1034
    %v1036 = vrot.slane %v1022, %v1035
    %v1037 = vcombine.low %v1029, %v1036
    %1040 = vst [vmem:[#allocation2] sm:$0xff] %v1020
    %1041 = vst [vmem:[#allocation2 + $0x8] sm:$0xff] %v1037
    // Predicated region
    $region38: #{tpu_custom_call.1} parent=1 // pred_check
      _
    $region39: #{tpu_custom_call.1} parent=1 // pred_check_branch
      %1043 = sbr.rel (0) target = $region41
    $region40: #{tpu_custom_call.1} parent=1 // pred_region
      %s1045 = ssub.s32 256, 256
      %1046 = vsyncadd [#allocation3], %s1045
      %s1048 = sshll.u32 [#allocation2], 4
      %s1049 = int_to_ptr.vmem [resolvable:$true] %s1048
      %1051 = dma.vmem_to_hbm [thread:$0]  %s1049, 256, %s9, [#allocation3]
    $region41: #{tpu_custom_call.1} parent=1 // pred_fallthru
      _
    // Predicated region
    $region42: #{tpu_custom_call.1} parent=1 // pred_check
      _
    $region43: #{tpu_custom_call.1} parent=1 // pred_check_branch
      %1053 = sbr.rel (0) target = $region45
    $region44: #{tpu_custom_call.1} parent=1 // pred_region
      %1054 = dma.done [#allocation3], 256
    $region45: #{tpu_custom_call.1} parent=1 // pred_fallthru
      _
    %1055 = vsyncpa [#allocation3], 1

</llo_original>
